<compile_context>
chip_gen: v7x
topology: tpu7x:2x2x1
jax: 0.10.0
libtpu: 0.0.40
codegen_flags: <defaults>
</compile_context>

<pallas_src>
import functools

import jax
import jax.numpy as jnp
import numpy as np
from jax.experimental import pallas as pl
from jax.experimental.pallas import tpu as pltpu

_LANE = 128


def _round_up(x, m):
    return ((x + m - 1) // m) * m


# ----------------------------------------------------------------------------
# Fused kernel: Linear(2E->E) -> LeakyReLU -> [Flatten/Dropout: no-ops] -> Linear(E->T_pad)
# ----------------------------------------------------------------------------
def corefnet_kernel(x_ref, w1_ref, b1_ref, w2_ref, b2_ref, out_ref, *, negative_slope):
    b1 = b1_ref[...]                 # (1, E)      f32, hoisted single load
    b2 = b2_ref[...]                 # (1, T_pad)  f32, hoisted single load

    # Linear(2E -> E): weights pre-transposed to (2E, E); low-precision operands, f32 accumulation.
    h = jnp.dot(x_ref[...], w1_ref[...], preferred_element_type=jnp.float32) + b1
    # LeakyReLU in f32 (VPU).
    h = jnp.where(h >= 0.0, h, negative_slope * h)
    # Linear(E -> T_pad): pre-transposed + lane-padded to (E, T_pad); lane-dense output store.
    y = jnp.dot(h.astype(w2_ref.dtype), w2_ref[...],
                preferred_element_type=jnp.float32) + b2
    out_ref[...] = y.astype(out_ref.dtype)


# ----------------------------------------------------------------------------
# One-time host-side parameter prep (hoisted out of the per-call path)
# ----------------------------------------------------------------------------
def prepare_corefnet_params(w1, b1, w2, b2, *, compute_dtype=jnp.bfloat16):
    """Transpose weights to (in, out), lane-pad tags to a multiple of 128, cast matmul
    operands to compute_dtype (biases stay f32)."""
    emb_dim, in_dim = w1.shape
    tags = w2.shape[0]
    assert w2.shape == (tags, emb_dim)
    assert b1.shape[-1] == emb_dim and b2.shape[-1] == tags
    t_pad = _round_up(tags, _LANE)

    w1t = jnp.asarray(w1, jnp.float32).T.astype(compute_dtype)                  # (2E, E)
    w2t = (jnp.zeros((emb_dim, t_pad), jnp.float32)
           .at[:, :tags].set(jnp.asarray(w2, jnp.float32).T)
           .astype(compute_dtype))                                              # (E, T_pad)
    b1r = jnp.asarray(b1, jnp.float32).reshape(1, emb_dim)                      # (1, E)
    b2r = (jnp.zeros((1, t_pad), jnp.float32)
           .at[0, :tags].set(jnp.asarray(b2, jnp.float32)))                     # (1, T_pad)
    return dict(w1t=w1t, b1r=b1r, w2t=w2t, b2r=b2r, tags=tags,
                emb_dim=emb_dim, in_dim=in_dim, compute_dtype=compute_dtype)


# ----------------------------------------------------------------------------
# Forward
# ----------------------------------------------------------------------------
def corefnet_forward_prepared(x, params, *, negative_slope=0.01, block_rows=None):
    in_dim, emb_dim, tags = params["in_dim"], params["emb_dim"], params["tags"]
    cdt = params["compute_dtype"]
    w1t, b1r, w2t, b2r = params["w1t"], params["b1r"], params["w2t"], params["b2r"]
    t_pad = w2t.shape[1]

    assert x.shape[-1] == in_dim
    # Flatten (custom): view(-1, last_dim) -- exact because both Linears touch only the last axis.
    x2 = x.reshape(-1, in_dim).astype(cdt)
    n = x2.shape[0]

    # ---- row tiling (multiples of 16 for bf16 sublane packing) ------------------------------
    if block_rows is None:
        if n <= 512:
            block_rows = max(16, _round_up(n, 16))                # one tile: overhead-dominated
        elif n <= 2048:
            block_rows = max(16, _round_up(pl.cdiv(n, 2), 16))    # >=2 tiles -> both v7x TCs busy
        else:
            block_rows = 1024                                     # big mem-bound tiles
    block_rows = max(16, _round_up(block_rows, 16))
    grid = (pl.cdiv(n, block_rows),)   # ragged last block: Pallas masks OOB loads / drops OOB stores

    # ---- VMEM budget: sized against v7x's 64 MiB, also lifts v5e's 16 MiB default scoped ----
    bpe = jnp.dtype(cdt).itemsize
    x_buf = block_rows * in_dim * bpe * 2                         # streamed input, double-buffered
    o_buf = block_rows * t_pad * 4 * 2                            # f32 output, double-buffered
    w_buf = (in_dim * emb_dim + emb_dim * t_pad) * bpe * 2 + (emb_dim + t_pad) * 4 * 2
    live = block_rows * (emb_dim + t_pad) * 4                     # h / y intermediates
    needed = int((x_buf + o_buf + w_buf + live) * 1.5) + (4 << 20)
    vmem_limit = min(max(needed, 16 << 20), 64 << 20)

    kernel = functools.partial(corefnet_kernel, negative_slope=negative_slope)

    def call(single_buffer_weights):
        const_kw = dict(pipeline_mode=pl.Buffered(1)) if single_buffer_weights else {}

        def const_spec(shape):
            return pl.BlockSpec(shape, lambda i: (0,) * len(shape), **const_kw)

        return pl.pallas_call(
            kernel,
            out_shape=jax.ShapeDtypeStruct((n, t_pad), jnp.float32),
            grid_spec=pltpu.PrefetchScalarGridSpec(
                num_scalar_prefetch=0,
                grid=grid,
                in_specs=[pl.BlockSpec((block_rows, in_dim), lambda i: (i, 0)),
                          const_spec(w1t.shape), const_spec(b1r.shape),
                          const_spec(w2t.shape), const_spec(b2r.shape)],
                out_specs=pl.BlockSpec((block_rows, t_pad), lambda i: (i, 0)),
            ),
            compiler_params=pltpu.CompilerParams(
                dimension_semantics=("parallel",),     # independent row tiles -> megacore-shardable
                vmem_limit_bytes=vmem_limit),
        )(x2, w1t, b1r, w2t, b2r)

    try:
        out = call(True)      # constant operands single-buffered (no wasted 2x weight VMEM)
    except Exception:         # compat fallback: JAX without BlockSpec.pipeline_mode / Buffered(1)
        out = call(False)

    return out[:, :tags]      # drop the lane pad; rows are already exactly n


def corefnet_forward(x, w1, b1, w2, b2, *, negative_slope=0.01,
                     compute_dtype=jnp.bfloat16, block_rows=None):
    params = prepare_corefnet_params(w1, b1, w2, b2, compute_dtype=compute_dtype)
    return corefnet_forward_prepared(x, params, negative_slope=negative_slope,
                                     block_rows=block_rows)


# ----------------------------------------------------------------------------
# Pure-JAX reference (mirrors the PyTorch module exactly, inference mode)
# ----------------------------------------------------------------------------
def reference_forward(x, w1, b1, w2, b2, negative_slope=0.01):
    h = x @ w1.T + b1                                  # Linear(2E -> E)
    h = jnp.where(h >= 0.0, h, negative_slope * h)     # LeakyReLU
    h = h.reshape(-1, h.shape[-1])                     # Flatten: view(-1, last_dim)
    return h @ w2.T + b2                               # Dropout = identity; Linear(E -> tags)


# ----------------------------------------------------------------------------
if __name__ == "__main__":
    B, P = 2, 8                 # leading dims (batch x mention-pairs)
    EMB_DIM, TAGS = 32, 8       # args.emb_dim, number of tags

    key = jax.random.PRNGKey(0)
    kx, k1, kb1, k2, kb2 = jax.random.split(key, 5)

    x = jax.random.normal(kx, (B, P, 2 * EMB_DIM), jnp.float32)
    w1 = jax.random.normal(k1, (EMB_DIM, 2 * EMB_DIM), jnp.float32) * 0.05
    b1 = jax.random.normal(kb1, (EMB_DIM,), jnp.float32) * 0.05
    w2 = jax.random.normal(k2, (TAGS, EMB_DIM), jnp.float32) * 0.05
    b2 = jax.random.normal(kb2, (TAGS,), jnp.float32) * 0.05

    ref = reference_forward(x, w1, b1, w2, b2)

    # f32 compute path: tight check against the pure-JAX reference.
    params_f32 = prepare_corefnet_params(w1, b1, w2, b2, compute_dtype=jnp.float32)
    out_f32 = jax.block_until_ready(corefnet_forward_prepared(x, params_f32))
    assert out_f32.shape == (B * P, TAGS)
    np.testing.assert_allclose(np.asarray(out_f32), np.asarray(ref), rtol=1e-4, atol=1e-4)

    # Default performance path: bf16 matmul operands, f32 accumulation (looser tolerance).
    params = prepare_corefnet_params(w1, b1, w2, b2)   # one-time host-side prep, hoisted
    out = jax.block_until_ready(corefnet_forward_prepared(x, params))
    assert out.shape == (B * P, TAGS)
    np.testing.assert_allclose(np.asarray(out), np.asarray(ref), rtol=3e-2, atol=3e-2)

    print("KERNEL_OK")
</pallas_src>

<mosaic_0001>
module attributes {stable_mosaic.version = 11 : i64} {
  func.func @corefnet_kernel(%arg0: i32, %arg1: memref<16x64xf32, #tpu.memory_space<vmem>>, %arg2: memref<64x32xf32, #tpu.memory_space<vmem>>, %arg3: memref<1x32xf32, #tpu.memory_space<vmem>>, %arg4: memref<32x128xf32, #tpu.memory_space<vmem>>, %arg5: memref<1x128xf32, #tpu.memory_space<vmem>>, %arg6: memref<16x128xf32, #tpu.memory_space<vmem>>) attributes {dimension_semantics = [#tpu.dimension_semantics<parallel>], iteration_bounds = array<i64: 1>, scalar_prefetch = 0 : i64, scratch_operands = 0 : i64, tpu.core_type = #tpu.core_type<tc>, window_params = [{transform_indices = @transform_0, window_bounds = array<i64: 16, 64>}, {pipeline_mode = #tpu.pipeline_mode<synchronous>, transform_indices = @transform_1, window_bounds = array<i64: 64, 32>}, {pipeline_mode = #tpu.pipeline_mode<synchronous>, transform_indices = @transform_2, window_bounds = array<i64: 1, 32>}, {pipeline_mode = #tpu.pipeline_mode<synchronous>, transform_indices = @transform_3, window_bounds = array<i64: 32, 128>}, {pipeline_mode = #tpu.pipeline_mode<synchronous>, transform_indices = @transform_4, window_bounds = array<i64: 1, 128>}, {transform_indices = @transform_5, window_bounds = array<i64: 16, 128>}]} {
    %c0 = arith.constant 0 : index
    %c0_0 = arith.constant 0 : index
    %0 = vector.load %arg3[%c0, %c0_0] : memref<1x32xf32, #tpu.memory_space<vmem>>, vector<1x32xf32>
    %c0_1 = arith.constant 0 : index
    %c0_2 = arith.constant 0 : index
    %1 = vector.load %arg5[%c0_1, %c0_2] : memref<1x128xf32, #tpu.memory_space<vmem>>, vector<1x128xf32>
    %c0_3 = arith.constant 0 : index
    %c0_4 = arith.constant 0 : index
    %2 = vector.load %arg1[%c0_3, %c0_4] : memref<16x64xf32, #tpu.memory_space<vmem>>, vector<16x64xf32>
    %c0_5 = arith.constant 0 : index
    %c0_6 = arith.constant 0 : index
    %3 = vector.load %arg2[%c0_5, %c0_6] : memref<64x32xf32, #tpu.memory_space<vmem>>, vector<64x32xf32>
    %cst = arith.constant dense<0.000000e+00> : vector<16x32xf32>
    %4 = tpu.matmul %2, %3, %cst {dimension_numbers = #tpu.dot_dimension_numbers<[1], [0], [0], [1], [0, 0, 1, 1], [], []>} : vector<16x64xf32>, vector<64x32xf32>, vector<16x32xf32> -> vector<16x32xf32>
    %5 = vector.broadcast %0 : vector<1x32xf32> to vector<16x32xf32>
    %6 = arith.addf %4, %5 : vector<16x32xf32>
    %cst_7 = arith.constant 0.000000e+00 : f32
    %7 = vector.broadcast %cst_7 : f32 to vector<16x32xf32>
    %8 = arith.cmpf oge, %6, %7 : vector<16x32xf32>
    %cst_8 = arith.constant 0.00999999977 : f32
    %9 = vector.broadcast %cst_8 : f32 to vector<16x32xf32>
    %10 = arith.mulf %9, %6 : vector<16x32xf32>
    %11 = arith.select %8, %6, %10 : vector<16x32xi1>, vector<16x32xf32>
    %c0_9 = arith.constant 0 : index
    %c0_10 = arith.constant 0 : index
    %12 = vector.load %arg4[%c0_9, %c0_10] : memref<32x128xf32, #tpu.memory_space<vmem>>, vector<32x128xf32>
    %cst_11 = arith.constant dense<0.000000e+00> : vector<16x128xf32>
    %13 = tpu.matmul %11, %12, %cst_11 {dimension_numbers = #tpu.dot_dimension_numbers<[1], [0], [0], [1], [0, 0, 1, 1], [], []>} : vector<16x32xf32>, vector<32x128xf32>, vector<16x128xf32> -> vector<16x128xf32>
    %14 = vector.broadcast %1 : vector<1x128xf32> to vector<16x128xf32>
    %15 = arith.addf %13, %14 : vector<16x128xf32>
    %c0_12 = arith.constant 0 : index
    %c0_13 = arith.constant 0 : index
    %16 = vector.load %arg6[%c0_12, %c0_13] : memref<16x128xf32, #tpu.memory_space<vmem>>, vector<16x128xf32>
    tpu.vector_store %arg6[%c0_12, %c0_13], %15 {strides = array<i32>} : memref<16x128xf32, #tpu.memory_space<vmem>>, vector<16x128xf32>,
    return
  }
  func.func @transform_0(%arg0: i32) -> (i32, i32) {
    %c0_i32 = arith.constant 0 : i32
    %c0_i32_0 = arith.constant 0 : i32
    return %arg0, %c0_i32 : i32, i32
  }
  func.func @transform_1(%arg0: i32) -> (i32, i32) {
    %c0_i32 = arith.constant 0 : i32
    %c0_i32_0 = arith.constant 0 : i32
    %c0_i32_1 = arith.constant 0 : i32
    return %c0_i32, %c0_i32_0 : i32, i32
  }
  func.func @transform_2(%arg0: i32) -> (i32, i32) {
    %c0_i32 = arith.constant 0 : i32
    %c0_i32_0 = arith.constant 0 : i32
    %c0_i32_1 = arith.constant 0 : i32
    return %c0_i32, %c0_i32_0 : i32, i32
  }
  func.func @transform_3(%arg0: i32) -> (i32, i32) {
    %c0_i32 = arith.constant 0 : i32
    %c0_i32_0 = arith.constant 0 : i32
    %c0_i32_1 = arith.constant 0 : i32
    return %c0_i32, %c0_i32_0 : i32, i32
  }
  func.func @transform_4(%arg0: i32) -> (i32, i32) {
    %c0_i32 = arith.constant 0 : i32
    %c0_i32_0 = arith.constant 0 : i32
    %c0_i32_1 = arith.constant 0 : i32
    return %c0_i32, %c0_i32_0 : i32, i32
  }
  func.func @transform_5(%arg0: i32) -> (i32, i32) {
    %c0_i32 = arith.constant 0 : i32
    %c0_i32_0 = arith.constant 0 : i32
    return %arg0, %c0_i32 : i32, i32
  }
}

module attributes {stable_mosaic.version = 11 : i64} {
  func.func @corefnet_kernel(%arg0: i32, %arg1: memref<16x64xf32, #tpu.memory_space<vmem>>, %arg2: memref<64x32xf32, #tpu.memory_space<vmem>>, %arg3: memref<1x32xf32, #tpu.memory_space<vmem>>, %arg4: memref<32x128xf32, #tpu.memory_space<vmem>>, %arg5: memref<1x128xf32, #tpu.memory_space<vmem>>, %arg6: memref<16x128xf32, #tpu.memory_space<vmem>>) attributes {dimension_semantics = [#tpu.dimension_semantics<parallel>], iteration_bounds = array<i64: 1>, scalar_prefetch = 0 : i64, scratch_operands = 0 : i64, tpu.core_type = #tpu.core_type<tc>, window_params = [{transform_indices = @transform_0, window_bounds = array<i64: 16, 64>}, {pipeline_mode = #tpu.pipeline_mode<synchronous>, transform_indices = @transform_1, window_bounds = array<i64: 64, 32>}, {pipeline_mode = #tpu.pipeline_mode<synchronous>, transform_indices = @transform_2, window_bounds = array<i64: 1, 32>}, {pipeline_mode = #tpu.pipeline_mode<synchronous>, transform_indices = @transform_3, window_bounds = array<i64: 32, 128>}, {pipeline_mode = #tpu.pipeline_mode<synchronous>, transform_indices = @transform_4, window_bounds = array<i64: 1, 128>}, {transform_indices = @transform_5, window_bounds = array<i64: 16, 128>}]} {
    %c0 = arith.constant 0 : index
    %c0_0 = arith.constant 0 : index
    %0 = vector.load %arg3[%c0, %c0_0] : memref<1x32xf32, #tpu.memory_space<vmem>>, vector<1x32xf32>
    %c0_1 = arith.constant 0 : index
    %c0_2 = arith.constant 0 : index
    %1 = vector.load %arg5[%c0_1, %c0_2] : memref<1x128xf32, #tpu.memory_space<vmem>>, vector<1x128xf32>
    %c0_3 = arith.constant 0 : index
    %c0_4 = arith.constant 0 : index
    %2 = vector.load %arg1[%c0_3, %c0_4] : memref<16x64xf32, #tpu.memory_space<vmem>>, vector<16x64xf32>
    %c0_5 = arith.constant 0 : index
    %c0_6 = arith.constant 0 : index
    %3 = vector.load %arg2[%c0_5, %c0_6] : memref<64x32xf32, #tpu.memory_space<vmem>>, vector<64x32xf32>
    %cst = arith.constant dense<0.000000e+00> : vector<16x32xf32>
    %4 = tpu.matmul %2, %3, %cst {dimension_numbers = #tpu.dot_dimension_numbers<[1], [0], [0], [1], [0, 0, 1, 1], [], []>} : vector<16x64xf32>, vector<64x32xf32>, vector<16x32xf32> -> vector<16x32xf32>
    %5 = vector.broadcast %0 : vector<1x32xf32> to vector<16x32xf32>
    %6 = arith.addf %4, %5 : vector<16x32xf32>
    %cst_7 = arith.constant 0.000000e+00 : f32
    %7 = vector.broadcast %cst_7 : f32 to vector<16x32xf32>
    %8 = arith.cmpf oge, %6, %7 : vector<16x32xf32>
    %cst_8 = arith.constant 0.00999999977 : f32
    %9 = vector.broadcast %cst_8 : f32 to vector<16x32xf32>
    %10 = arith.mulf %9, %6 : vector<16x32xf32>
    %11 = arith.select %8, %6, %10 : vector<16x32xi1>, vector<16x32xf32>
    %c0_9 = arith.constant 0 : index
    %c0_10 = arith.constant 0 : index
    %12 = vector.load %arg4[%c0_9, %c0_10] : memref<32x128xf32, #tpu.memory_space<vmem>>, vector<32x128xf32>
    %cst_11 = arith.constant dense<0.000000e+00> : vector<16x128xf32>
    %13 = tpu.matmul %11, %12, %cst_11 {dimension_numbers = #tpu.dot_dimension_numbers<[1], [0], [0], [1], [0, 0, 1, 1], [], []>} : vector<16x32xf32>, vector<32x128xf32>, vector<16x128xf32> -> vector<16x128xf32>
    %14 = vector.broadcast %1 : vector<1x128xf32> to vector<16x128xf32>
    %15 = arith.addf %13, %14 : vector<16x128xf32>
    %c0_12 = arith.constant 0 : index
    %c0_13 = arith.constant 0 : index
    %16 = vector.load %arg6[%c0_12, %c0_13] : memref<16x128xf32, #tpu.memory_space<vmem>>, vector<16x128xf32>
    tpu.vector_store %arg6[%c0_12, %c0_13], %15 {strides = array<i32>} : memref<16x128xf32, #tpu.memory_space<vmem>>, vector<16x128xf32>,
    return
  }
  func.func @transform_0(%arg0: i32) -> (i32, i32) {
    %c0_i32 = arith.constant 0 : i32
    %c0_i32_0 = arith.constant 0 : i32
    return %arg0, %c0_i32 : i32, i32
  }
  func.func @transform_1(%arg0: i32) -> (i32, i32) {
    %c0_i32 = arith.constant 0 : i32
    %c0_i32_0 = arith.constant 0 : i32
    %c0_i32_1 = arith.constant 0 : i32
    return %c0_i32, %c0_i32_0 : i32, i32
  }
  func.func @transform_2(%arg0: i32) -> (i32, i32) {
    %c0_i32 = arith.constant 0 : i32
    %c0_i32_0 = arith.constant 0 : i32
    %c0_i32_1 = arith.constant 0 : i32
    return %c0_i32, %c0_i32_0 : i32, i32
  }
  func.func @transform_3(%arg0: i32) -> (i32, i32) {
    %c0_i32 = arith.constant 0 : i32
    %c0_i32_0 = arith.constant 0 : i32
    %c0_i32_1 = arith.constant 0 : i32
    return %c0_i32, %c0_i32_0 : i32, i32
  }
  func.func @transform_4(%arg0: i32) -> (i32, i32) {
    %c0_i32 = arith.constant 0 : i32
    %c0_i32_0 = arith.constant 0 : i32
    %c0_i32_1 = arith.constant 0 : i32
    return %c0_i32, %c0_i32_0 : i32, i32
  }
  func.func @transform_5(%arg0: i32) -> (i32, i32) {
    %c0_i32 = arith.constant 0 : i32
    %c0_i32_0 = arith.constant 0 : i32
    return %arg0, %c0_i32 : i32, i32
  }
}

</mosaic_0001>

<llo_original>
// kernel: tpu_custom_call.1
$region0: #{tpu_custom_call.1}
  #allocation0 [shape = 'u32[]', space=smem, size = 0x4, offset = 0x4, fixed_abs, tag = 'smem constant byte address 0x4 - core index']
  #allocation1 [shape = 'u32[144,128]{1,0:T(1,128)}', space=vmem, size = 0x12000, scoped, tag = 'internal scratch']
  %s0 = inlined_call_operand.vmem [shape: f32[16,64], index: 0, kind: input, shape index: {}]
  %s1 = inlined_call_operand.vmem [shape: f32[64,32], index: 1, kind: input, shape index: {}]
  %s2 = inlined_call_operand.vmem [shape: f32[1,32], index: 2, kind: input, shape index: {}]
  %s3 = inlined_call_operand.vmem [shape: f32[32,128], index: 3, kind: input, shape index: {}]
  %s4 = inlined_call_operand.vmem [shape: f32[1,128], index: 4, kind: input, shape index: {}]
  %s5 = inlined_call_operand.hbm [shape: f32[16,128], index: 5, kind: output, shape index: {}]
  %s6 = sld [smem:[#allocation0]]
  $region30: #{tpu_custom_call.1} parent=0
    _
  %s8 = ssub.s32 1, %s6
  %s9 = scalar_select 0, %s8, %s6
  $region1: #{tpu_custom_call.1} parent=0
    #allocation2 [shape = 'u8[8192]{0}', space=vmem, size = 0x2000, scoped, tag = 'output window, operand 0, single buffered']
    #allocation3 [shape = 's32[1]{0}', space=sflag, size = 0x4, scoped, tag = 'scoped memory for tpu_custom_call.1']
    %10 = vsyncpa [#allocation3], 0
    // Predicated region
    $region2: #{tpu_custom_call.1} parent=1 // pred_check
      _
    $region3: #{tpu_custom_call.1} parent=1 // pred_check_branch
      %12 = sbr.rel (0) target = $region5
    $region4: #{tpu_custom_call.1} parent=1 // pred_region
      _
    $region5: #{tpu_custom_call.1} parent=1 // pred_fallthru
      _
    // Predicated region
    $region6: #{tpu_custom_call.1} parent=1 // pred_check
      _
    $region7: #{tpu_custom_call.1} parent=1 // pred_check_branch
      %14 = sbr.rel (0) target = $region9
    $region8: #{tpu_custom_call.1} parent=1 // pred_region
      _
    $region9: #{tpu_custom_call.1} parent=1 // pred_fallthru
      _
    // Predicated region
    $region10: #{tpu_custom_call.1} parent=1 // pred_check
      _
    $region11: #{tpu_custom_call.1} parent=1 // pred_check_branch
      %16 = sbr.rel (0) target = $region13
    $region12: #{tpu_custom_call.1} parent=1 // pred_region
      _
    $region13: #{tpu_custom_call.1} parent=1 // pred_fallthru
      _
    // Predicated region
    $region14: #{tpu_custom_call.1} parent=1 // pred_check
      _
    $region15: #{tpu_custom_call.1} parent=1 // pred_check_branch
      %18 = sbr.rel (0) target = $region17
    $region16: #{tpu_custom_call.1} parent=1 // pred_region
      _
    $region17: #{tpu_custom_call.1} parent=1 // pred_fallthru
      _
    // Predicated region
    $region18: #{tpu_custom_call.1} parent=1 // pred_check
      _
    $region19: #{tpu_custom_call.1} parent=1 // pred_check_branch
      %20 = sbr.rel (0) target = $region21
    $region20: #{tpu_custom_call.1} parent=1 // pred_region
      _
    $region21: #{tpu_custom_call.1} parent=1 // pred_fallthru
      _
    %v21 = vld [vmem:[%s2] sm:$0x1]
    %v22 = vld [vmem:[%s4] sm:$0x1]
    %v23 = vld [vmem:[%s0] sm:$0xff]
    %v24 = vld [vmem:[%s0 + $0x8] sm:$0xff]
    %v25 = vld [vmem:[%s1] sm:$0xff]
    %v26 = vld [vmem:[%s1 + $0x8] sm:$0xff]
    %v27 = vld [vmem:[%s1 + $0x10] sm:$0xff]
    %v28 = vld [vmem:[%s1 + $0x18] sm:$0xff]
    %v29 = vld [vmem:[%s1 + $0x20] sm:$0xff]
    %v30 = vld [vmem:[%s1 + $0x28] sm:$0xff]
    %v31 = vld [vmem:[%s1 + $0x30] sm:$0xff]
    %v32 = vld [vmem:[%s1 + $0x38] sm:$0xff]
    %v34 = vlaneseq
    %v35 = vshrl.u32 %v34, 7
    %v36 = vsub.s32 0, %v35
    %v37 = vrot.slane %v21, %v36
    %vm39 = vcmask 523264
    %v41 = vsel %vm39, %v23, 0
    %v44 = vsel %vm39, %v24, 0
    %46 = vmatprep.subr.mxu0 0.0
    %47 = vmatpush1.msra.mxu0 %v25
    %48 = vmatprep.subr.mxu0 0.0
    %49 = vmatpush1.msra.mxu0 %v26
    %50 = vmatprep.subr.mxu0 0.0
    %51 = vmatpush1.msra.mxu0 %v27
    %52 = vmatprep.subr.mxu0 0.0
    %53 = vmatpush1.msra.mxu0 %v28
    %54 = vmatprep.subr.mxu0 0.0
    %55 = vmatpush1.msra.mxu0 %v29
    %56 = vmatprep.subr.mxu0 0.0
    %57 = vmatpush1.msra.mxu0 %v30
    %58 = vmatprep.subr.mxu0 0.0
    %59 = vmatpush1.msra.mxu0 %v31
    %60 = vmatprep.subr.mxu0 0.0
    %61 = vmatpush1.msra.mxu0 %v32
    %62 = vmatprep.subr.mxu0 0.0
    %63 = vmatpush1.msra.mxu0 0.0
    %64 = vmatprep.subr.mxu0 0.0
    %65 = vmatpush1.msra.mxu0 0.0
    %66 = vmatprep.subr.mxu0 0.0
    %67 = vmatpush1.msra.mxu0 0.0
    %68 = vmatprep.subr.mxu0 0.0
    %69 = vmatpush1.msra.mxu0 0.0
    %70 = vmatprep.subr.mxu0 0.0
    %71 = vmatpush1.msra.mxu0 0.0
    %72 = vmatprep.subr.mxu0 0.0
    %73 = vmatpush1.msra.mxu0 0.0
    %74 = vmatprep.subr.mxu0 0.0
    %75 = vmatpush1.msra.mxu0 0.0
    %76 = vmatprep.subr.mxu0 0.0
    %77 = vmatpush1.msra.mxu0 0.0
    %78 = vmatprep.subr.mxu0 0.0
    %79 = vmatpush1.msra.mxu0 0.0
    %80 = vmatprep.subr.mxu0 0.0
    %81 = vmatpush1.msra.mxu0 0.0
    %82 = vmatprep.subr.mxu0 0.0
    %83 = vmatpush1.msra.mxu0 0.0
    %84 = vmatprep.subr.mxu0 0.0
    %85 = vmatpush1.msra.mxu0 0.0
    %86 = vmatprep.subr.mxu0 0.0
    %87 = vmatpush1.msra.mxu0 0.0
    %88 = vmatprep.subr.mxu0 0.0
    %89 = vmatpush1.msra.mxu0 0.0
    %90 = vmatprep.subr.mxu0 0.0
    %91 = vmatpush1.msra.mxu0 0.0
    %92 = vmatprep.subr.mxu0 0.0
    %93 = vmatpush1.msra.mxu0 0.0
    %94 = vmatprep.subr.mxu0 0.0
    %95 = vmatpush1.msra.mxu0 0.0
    %96 = vmatprep.subr.mxu0 0.0
    %97 = vmatpush1.msra.mxu0 0.0
    %98 = vmatprep.subr.mxu0 0.0
    %99 = vmatpush1.msra.mxu0 0.0
    %100 = vmatprep.subr.mxu0 0.0
    %101 = vmatpush1.msra.mxu0 0.0
    %102 = vmatprep.subr.mxu0 0.0
    %103 = vmatpush1.msra.mxu0 0.0
    %104 = vmatprep.subr.mxu0 0.0
    %105 = vmatpush1.msra.mxu0 0.0
    %106 = vmatprep.subr.mxu0 0.0
    %107 = vmatpush1.msra.mxu0 0.0
    %108 = vmatprep.subr.mxu0 0.0
    %109 = vmatpush1.msra.mxu0 0.0
    %110 = vmatprep.mubr.f32.mxu0 0.0
    %111 = vmatmul.mubr.f32.gmra.mrb[0].mxu0 %v41
    %v112 = vpop.f32.mrb[0].mxu0
    %v113 = vadd.f32 %v37, %v112
    %v114 = vpop.f32.mrb[0].mxu0
    %115 = vmatprep.mubr.f32.mxu0 0.0
    %116 = vmatmul.mubr.f32.gmra.mrb[0].mxu0 %v44
    %v117 = vpop.f32.mrb[0].mxu0
    %v118 = vadd.f32 %v37, %v117
    %v119 = vpop.f32.mrb[0].mxu0
    %120 = vdwg.mxu0
    %vm121 = vcmp.ge.f32.partialorder %v113, 0.0
    %vm122 = vcmp.ge.f32.partialorder %v118, 0.0
    %v123 = vmul.f32 %v113, 0.01
    %v124 = vmul.f32 %v118, 0.01
    %v125 = vsel %vm121, %v113, %v123
    %v126 = vsel %vm122, %v118, %v124
    %v127 = vld [vmem:[%s3] sm:$0xff]
    %v128 = vld [vmem:[%s3 + $0x8] sm:$0xff]
    %v129 = vld [vmem:[%s3 + $0x10] sm:$0xff]
    %v130 = vld [vmem:[%s3 + $0x18] sm:$0xff]
    %v132 = vlaneseq
    %v133 = vshrl.u32 %v132, 7
    %v134 = vsub.s32 0, %v133
    %v135 = vrot.slane %v22, %v134
    %vm137 = vcmask 261120
    %v139 = vsel %vm137, %v125, 0
    %v142 = vsel %vm137, %v126, 0
    %144 = vmatprep.subr.mxu0 0.0
    %145 = vmatpush1.msra.mxu0 %v127
    %146 = vmatprep.subr.mxu0 0.0
    %147 = vmatpush1.msra.mxu0 %v128
    %148 = vmatprep.subr.mxu0 0.0
    %149 = vmatpush1.msra.mxu0 %v129
    %150 = vmatprep.subr.mxu0 0.0
    %151 = vmatpush1.msra.mxu0 %v130
    %152 = vmatprep.subr.mxu0 0.0
    %153 = vmatpush1.msra.mxu0 0.0
    %154 = vmatprep.subr.mxu0 0.0
    %155 = vmatpush1.msra.mxu0 0.0
    %156 = vmatprep.subr.mxu0 0.0
    %157 = vmatpush1.msra.mxu0 0.0
    %158 = vmatprep.subr.mxu0 0.0
    %159 = vmatpush1.msra.mxu0 0.0
    %160 = vmatprep.subr.mxu0 0.0
    %161 = vmatpush1.msra.mxu0 0.0
    %162 = vmatprep.subr.mxu0 0.0
    %163 = vmatpush1.msra.mxu0 0.0
    %164 = vmatprep.subr.mxu0 0.0
    %165 = vmatpush1.msra.mxu0 0.0
    %166 = vmatprep.subr.mxu0 0.0
    %167 = vmatpush1.msra.mxu0 0.0
    %168 = vmatprep.subr.mxu0 0.0
    %169 = vmatpush1.msra.mxu0 0.0
    %170 = vmatprep.subr.mxu0 0.0
    %171 = vmatpush1.msra.mxu0 0.0
    %172 = vmatprep.subr.mxu0 0.0
    %173 = vmatpush1.msra.mxu0 0.0
    %174 = vmatprep.subr.mxu0 0.0
    %175 = vmatpush1.msra.mxu0 0.0
    %176 = vmatprep.subr.mxu0 0.0
    %177 = vmatpush1.msra.mxu0 0.0
    %178 = vmatprep.subr.mxu0 0.0
    %179 = vmatpush1.msra.mxu0 0.0
    %180 = vmatprep.subr.mxu0 0.0
    %181 = vmatpush1.msra.mxu0 0.0
    %182 = vmatprep.subr.mxu0 0.0
    %183 = vmatpush1.msra.mxu0 0.0
    %184 = vmatprep.subr.mxu0 0.0
    %185 = vmatpush1.msra.mxu0 0.0
    %186 = vmatprep.subr.mxu0 0.0
    %187 = vmatpush1.msra.mxu0 0.0
    %188 = vmatprep.subr.mxu0 0.0
    %189 = vmatpush1.msra.mxu0 0.0
    %190 = vmatprep.subr.mxu0 0.0
    %191 = vmatpush1.msra.mxu0 0.0
    %192 = vmatprep.subr.mxu0 0.0
    %193 = vmatpush1.msra.mxu0 0.0
    %194 = vmatprep.subr.mxu0 0.0
    %195 = vmatpush1.msra.mxu0 0.0
    %196 = vmatprep.subr.mxu0 0.0
    %197 = vmatpush1.msra.mxu0 0.0
    %198 = vmatprep.subr.mxu0 0.0
    %199 = vmatpush1.msra.mxu0 0.0
    %200 = vmatprep.subr.mxu0 0.0
    %201 = vmatpush1.msra.mxu0 0.0
    %202 = vmatprep.subr.mxu0 0.0
    %203 = vmatpush1.msra.mxu0 0.0
    %204 = vmatprep.subr.mxu0 0.0
    %205 = vmatpush1.msra.mxu0 0.0
    %206 = vmatprep.subr.mxu0 0.0
    %207 = vmatpush1.msra.mxu0 0.0
    %208 = vmatprep.mubr.f32.mxu0 0.0
    %209 = vmatmul.mubr.f32.gmra.mrb[0].mxu0 %v139
    %v210 = vpop.f32.mrb[0].mxu0
    %v211 = vadd.f32 %v135, %v210
    %v212 = vpop.f32.mrb[0].mxu0
    %213 = vmatprep.mubr.f32.mxu0 0.0
    %214 = vmatmul.mubr.f32.gmra.mrb[0].mxu0 %v142
    %v215 = vpop.f32.mrb[0].mxu0
    %v216 = vadd.f32 %v135, %v215
    %v217 = vpop.f32.mrb[0].mxu0
    %218 = vdwg.mxu0
    %219 = vst [vmem:[#allocation2] sm:$0xff] %v211
    %220 = vst [vmem:[#allocation2 + $0x8] sm:$0xff] %v216
    // Predicated region
    $region22: #{tpu_custom_call.1} parent=1 // pred_check
      _
    $region23: #{tpu_custom_call.1} parent=1 // pred_check_branch
      %222 = sbr.rel (0) target = $region25
    $region24: #{tpu_custom_call.1} parent=1 // pred_region
      %s224 = ssub.s32 256, 256
      %225 = vsyncadd [#allocation3], %s224
      %s226 = sshll.u32 [#allocation2], 4
      %s227 = int_to_ptr.vmem [resolvable:$true] %s226
      %232 = dma.vmem_to_hbm [thread:$0]  %s227, 256, %s5, [#allocation3], 128, 128, 8
    $region25: #{tpu_custom_call.1} parent=1 // pred_fallthru
      _
    // Predicated region
    $region26: #{tpu_custom_call.1} parent=1 // pred_check
      _
    $region27: #{tpu_custom_call.1} parent=1 // pred_check_branch
      %234 = sbr.rel (0) target = $region29
    $region28: #{tpu_custom_call.1} parent=1 // pred_region
      %235 = dma.done [#allocation3], 256
    $region29: #{tpu_custom_call.1} parent=1 // pred_fallthru
      _
    %236 = vsyncpa [#allocation3], 1

// kernel: tpu_custom_call.1
$region0: #{tpu_custom_call.1}
  #allocation0 [shape = 'u32[]', space=smem, size = 0x4, offset = 0x4, fixed_abs, tag = 'smem constant byte address 0x4 - core index']
  #allocation1 [shape = 'u32[144,128]{1,0:T(1,128)}', space=vmem, size = 0x12000, scoped, tag = 'internal scratch']
  %s0 = inlined_call_operand.vmem [shape: f32[16,64], index: 0, kind: input, shape index: {}]
  %s1 = inlined_call_operand.vmem [shape: f32[64,32], index: 1, kind: input, shape index: {}]
  %s2 = inlined_call_operand.vmem [shape: f32[1,32], index: 2, kind: input, shape index: {}]
  %s3 = inlined_call_operand.vmem [shape: f32[32,128], index: 3, kind: input, shape index: {}]
  %s4 = inlined_call_operand.vmem [shape: f32[1,128], index: 4, kind: input, shape index: {}]
  %s5 = inlined_call_operand.hbm [shape: f32[16,128], index: 5, kind: output, shape index: {}]
  %s6 = sld [smem:[#allocation0]]
  $region30: #{tpu_custom_call.1} parent=0
    _
  %s8 = ssub.s32 1, %s6
  %s9 = scalar_select 0, %s8, %s6
  $region1: #{tpu_custom_call.1} parent=0
    #allocation2 [shape = 'u8[8192]{0}', space=vmem, size = 0x2000, scoped, tag = 'output window, operand 0, single buffered']
    #allocation3 [shape = 's32[1]{0}', space=sflag, size = 0x4, scoped, tag = 'scoped memory for tpu_custom_call.1']
    %10 = vsyncpa [#allocation3], 0
    // Predicated region
    $region2: #{tpu_custom_call.1} parent=1 // pred_check
      _
    $region3: #{tpu_custom_call.1} parent=1 // pred_check_branch
      %12 = sbr.rel (0) target = $region5
    $region4: #{tpu_custom_call.1} parent=1 // pred_region
      _
    $region5: #{tpu_custom_call.1} parent=1 // pred_fallthru
      _
    // Predicated region
    $region6: #{tpu_custom_call.1} parent=1 // pred_check
      _
    $region7: #{tpu_custom_call.1} parent=1 // pred_check_branch
      %14 = sbr.rel (0) target = $region9
    $region8: #{tpu_custom_call.1} parent=1 // pred_region
      _
    $region9: #{tpu_custom_call.1} parent=1 // pred_fallthru
      _
    // Predicated region
    $region10: #{tpu_custom_call.1} parent=1 // pred_check
      _
    $region11: #{tpu_custom_call.1} parent=1 // pred_check_branch
      %16 = sbr.rel (0) target = $region13
    $region12: #{tpu_custom_call.1} parent=1 // pred_region
      _
    $region13: #{tpu_custom_call.1} parent=1 // pred_fallthru
      _
    // Predicated region
    $region14: #{tpu_custom_call.1} parent=1 // pred_check
      _
    $region15: #{tpu_custom_call.1} parent=1 // pred_check_branch
      %18 = sbr.rel (0) target = $region17
    $region16: #{tpu_custom_call.1} parent=1 // pred_region
      _
    $region17: #{tpu_custom_call.1} parent=1 // pred_fallthru
      _
    // Predicated region
    $region18: #{tpu_custom_call.1} parent=1 // pred_check
      _
    $region19: #{tpu_custom_call.1} parent=1 // pred_check_branch
      %20 = sbr.rel (0) target = $region21
    $region20: #{tpu_custom_call.1} parent=1 // pred_region
      _
    $region21: #{tpu_custom_call.1} parent=1 // pred_fallthru
      _
    %v21 = vld [vmem:[%s2] sm:$0x1]
    %v22 = vld [vmem:[%s4] sm:$0x1]
    %v23 = vld [vmem:[%s0] sm:$0xff]
    %v24 = vld [vmem:[%s0 + $0x8] sm:$0xff]
    %v25 = vld [vmem:[%s1] sm:$0xff]
    %v26 = vld [vmem:[%s1 + $0x8] sm:$0xff]
    %v27 = vld [vmem:[%s1 + $0x10] sm:$0xff]
    %v28 = vld [vmem:[%s1 + $0x18] sm:$0xff]
    %v29 = vld [vmem:[%s1 + $0x20] sm:$0xff]
    %v30 = vld [vmem:[%s1 + $0x28] sm:$0xff]
    %v31 = vld [vmem:[%s1 + $0x30] sm:$0xff]
    %v32 = vld [vmem:[%s1 + $0x38] sm:$0xff]
    %v34 = vlaneseq
    %v35 = vshrl.u32 %v34, 7
    %v36 = vsub.s32 0, %v35
    %v37 = vrot.slane %v21, %v36
    %vm39 = vcmask 523264
    %v41 = vsel %vm39, %v23, 0
    %v44 = vsel %vm39, %v24, 0
    %46 = vmatprep.subr.mxu0 0.0
    %47 = vmatpush1.msra.mxu0 %v25
    %48 = vmatprep.subr.mxu0 0.0
    %49 = vmatpush1.msra.mxu0 %v26
    %50 = vmatprep.subr.mxu0 0.0
    %51 = vmatpush1.msra.mxu0 %v27
    %52 = vmatprep.subr.mxu0 0.0
    %53 = vmatpush1.msra.mxu0 %v28
    %54 = vmatprep.subr.mxu0 0.0
    %55 = vmatpush1.msra.mxu0 %v29
    %56 = vmatprep.subr.mxu0 0.0
    %57 = vmatpush1.msra.mxu0 %v30
    %58 = vmatprep.subr.mxu0 0.0
    %59 = vmatpush1.msra.mxu0 %v31
    %60 = vmatprep.subr.mxu0 0.0
    %61 = vmatpush1.msra.mxu0 %v32
    %62 = vmatprep.subr.mxu0 0.0
    %63 = vmatpush1.msra.mxu0 0.0
    %64 = vmatprep.subr.mxu0 0.0
    %65 = vmatpush1.msra.mxu0 0.0
    %66 = vmatprep.subr.mxu0 0.0
    %67 = vmatpush1.msra.mxu0 0.0
    %68 = vmatprep.subr.mxu0 0.0
    %69 = vmatpush1.msra.mxu0 0.0
    %70 = vmatprep.subr.mxu0 0.0
    %71 = vmatpush1.msra.mxu0 0.0
    %72 = vmatprep.subr.mxu0 0.0
    %73 = vmatpush1.msra.mxu0 0.0
    %74 = vmatprep.subr.mxu0 0.0
    %75 = vmatpush1.msra.mxu0 0.0
    %76 = vmatprep.subr.mxu0 0.0
    %77 = vmatpush1.msra.mxu0 0.0
    %78 = vmatprep.subr.mxu0 0.0
    %79 = vmatpush1.msra.mxu0 0.0
    %80 = vmatprep.subr.mxu0 0.0
    %81 = vmatpush1.msra.mxu0 0.0
    %82 = vmatprep.subr.mxu0 0.0
    %83 = vmatpush1.msra.mxu0 0.0
    %84 = vmatprep.subr.mxu0 0.0
    %85 = vmatpush1.msra.mxu0 0.0
    %86 = vmatprep.subr.mxu0 0.0
    %87 = vmatpush1.msra.mxu0 0.0
    %88 = vmatprep.subr.mxu0 0.0
    %89 = vmatpush1.msra.mxu0 0.0
    %90 = vmatprep.subr.mxu0 0.0
    %91 = vmatpush1.msra.mxu0 0.0
    %92 = vmatprep.subr.mxu0 0.0
    %93 = vmatpush1.msra.mxu0 0.0
    %94 = vmatprep.subr.mxu0 0.0
    %95 = vmatpush1.msra.mxu0 0.0
    %96 = vmatprep.subr.mxu0 0.0
    %97 = vmatpush1.msra.mxu0 0.0
    %98 = vmatprep.subr.mxu0 0.0
    %99 = vmatpush1.msra.mxu0 0.0
    %100 = vmatprep.subr.mxu0 0.0
    %101 = vmatpush1.msra.mxu0 0.0
    %102 = vmatprep.subr.mxu0 0.0
    %103 = vmatpush1.msra.mxu0 0.0
    %104 = vmatprep.subr.mxu0 0.0
    %105 = vmatpush1.msra.mxu0 0.0
    %106 = vmatprep.subr.mxu0 0.0
    %107 = vmatpush1.msra.mxu0 0.0
    %108 = vmatprep.subr.mxu0 0.0
    %109 = vmatpush1.msra.mxu0 0.0
    %110 = vmatprep.mubr.f32.mxu0 0.0
    %111 = vmatmul.mubr.f32.gmra.mrb[0].mxu0 %v41
    %v112 = vpop.f32.mrb[0].mxu0
    %v113 = vadd.f32 %v37, %v112
    %v114 = vpop.f32.mrb[0].mxu0
    %115 = vmatprep.mubr.f32.mxu0 0.0
    %116 = vmatmul.mubr.f32.gmra.mrb[0].mxu0 %v44
    %v117 = vpop.f32.mrb[0].mxu0
    %v118 = vadd.f32 %v37, %v117
    %v119 = vpop.f32.mrb[0].mxu0
    %120 = vdwg.mxu0
    %vm121 = vcmp.ge.f32.partialorder %v113, 0.0
    %vm122 = vcmp.ge.f32.partialorder %v118, 0.0
    %v123 = vmul.f32 %v113, 0.01
    %v124 = vmul.f32 %v118, 0.01
    %v125 = vsel %vm121, %v113, %v123
    %v126 = vsel %vm122, %v118, %v124
    %v127 = vld [vmem:[%s3] sm:$0xff]
    %v128 = vld [vmem:[%s3 + $0x8] sm:$0xff]
    %v129 = vld [vmem:[%s3 + $0x10] sm:$0xff]
    %v130 = vld [vmem:[%s3 + $0x18] sm:$0xff]
    %v132 = vlaneseq
    %v133 = vshrl.u32 %v132, 7
    %v134 = vsub.s32 0, %v133
    %v135 = vrot.slane %v22, %v134
    %vm137 = vcmask 261120
    %v139 = vsel %vm137, %v125, 0
    %v142 = vsel %vm137, %v126, 0
    %144 = vmatprep.subr.mxu0 0.0
    %145 = vmatpush1.msra.mxu0 %v127
    %146 = vmatprep.subr.mxu0 0.0
    %147 = vmatpush1.msra.mxu0 %v128
    %148 = vmatprep.subr.mxu0 0.0
    %149 = vmatpush1.msra.mxu0 %v129
    %150 = vmatprep.subr.mxu0 0.0
    %151 = vmatpush1.msra.mxu0 %v130
    %152 = vmatprep.subr.mxu0 0.0
    %153 = vmatpush1.msra.mxu0 0.0
    %154 = vmatprep.subr.mxu0 0.0
    %155 = vmatpush1.msra.mxu0 0.0
    %156 = vmatprep.subr.mxu0 0.0
    %157 = vmatpush1.msra.mxu0 0.0
    %158 = vmatprep.subr.mxu0 0.0
    %159 = vmatpush1.msra.mxu0 0.0
    %160 = vmatprep.subr.mxu0 0.0
    %161 = vmatpush1.msra.mxu0 0.0
    %162 = vmatprep.subr.mxu0 0.0
    %163 = vmatpush1.msra.mxu0 0.0
    %164 = vmatprep.subr.mxu0 0.0
    %165 = vmatpush1.msra.mxu0 0.0
    %166 = vmatprep.subr.mxu0 0.0
    %167 = vmatpush1.msra.mxu0 0.0
    %168 = vmatprep.subr.mxu0 0.0
    %169 = vmatpush1.msra.mxu0 0.0
    %170 = vmatprep.subr.mxu0 0.0
    %171 = vmatpush1.msra.mxu0 0.0
    %172 = vmatprep.subr.mxu0 0.0
    %173 = vmatpush1.msra.mxu0 0.0
    %174 = vmatprep.subr.mxu0 0.0
    %175 = vmatpush1.msra.mxu0 0.0
    %176 = vmatprep.subr.mxu0 0.0
    %177 = vmatpush1.msra.mxu0 0.0
    %178 = vmatprep.subr.mxu0 0.0
    %179 = vmatpush1.msra.mxu0 0.0
    %180 = vmatprep.subr.mxu0 0.0
    %181 = vmatpush1.msra.mxu0 0.0
    %182 = vmatprep.subr.mxu0 0.0
    %183 = vmatpush1.msra.mxu0 0.0
    %184 = vmatprep.subr.mxu0 0.0
    %185 = vmatpush1.msra.mxu0 0.0
    %186 = vmatprep.subr.mxu0 0.0
    %187 = vmatpush1.msra.mxu0 0.0
    %188 = vmatprep.subr.mxu0 0.0
    %189 = vmatpush1.msra.mxu0 0.0
    %190 = vmatprep.subr.mxu0 0.0
    %191 = vmatpush1.msra.mxu0 0.0
    %192 = vmatprep.subr.mxu0 0.0
    %193 = vmatpush1.msra.mxu0 0.0
    %194 = vmatprep.subr.mxu0 0.0
    %195 = vmatpush1.msra.mxu0 0.0
    %196 = vmatprep.subr.mxu0 0.0
    %197 = vmatpush1.msra.mxu0 0.0
    %198 = vmatprep.subr.mxu0 0.0
    %199 = vmatpush1.msra.mxu0 0.0
    %200 = vmatprep.subr.mxu0 0.0
    %201 = vmatpush1.msra.mxu0 0.0
    %202 = vmatprep.subr.mxu0 0.0
    %203 = vmatpush1.msra.mxu0 0.0
    %204 = vmatprep.subr.mxu0 0.0
    %205 = vmatpush1.msra.mxu0 0.0
    %206 = vmatprep.subr.mxu0 0.0
    %207 = vmatpush1.msra.mxu0 0.0
    %208 = vmatprep.mubr.f32.mxu0 0.0
    %209 = vmatmul.mubr.f32.gmra.mrb[0].mxu0 %v139
    %v210 = vpop.f32.mrb[0].mxu0
    %v211 = vadd.f32 %v135, %v210
    %v212 = vpop.f32.mrb[0].mxu0
    %213 = vmatprep.mubr.f32.mxu0 0.0
    %214 = vmatmul.mubr.f32.gmra.mrb[0].mxu0 %v142
    %v215 = vpop.f32.mrb[0].mxu0
    %v216 = vadd.f32 %v135, %v215
    %v217 = vpop.f32.mrb[0].mxu0
    %218 = vdwg.mxu0
    %219 = vst [vmem:[#allocation2] sm:$0xff] %v211
    %220 = vst [vmem:[#allocation2 + $0x8] sm:$0xff] %v216
    // Predicated region
    $region22: #{tpu_custom_call.1} parent=1 // pred_check
      _
    $region23: #{tpu_custom_call.1} parent=1 // pred_check_branch
      %222 = sbr.rel (0) target = $region25
    $region24: #{tpu_custom_call.1} parent=1 // pred_region
      %s224 = ssub.s32 256, 256
      %225 = vsyncadd [#allocation3], %s224
      %s226 = sshll.u32 [#allocation2], 4
      %s227 = int_to_ptr.vmem [resolvable:$true] %s226
      %232 = dma.vmem_to_hbm [thread:$0]  %s227, 256, %s5, [#allocation3], 128, 128, 8
    $region25: #{tpu_custom_call.1} parent=1 // pred_fallthru
      _
    // Predicated region
    $region26: #{tpu_custom_call.1} parent=1 // pred_check
      _
    $region27: #{tpu_custom_call.1} parent=1 // pred_check_branch
      %234 = sbr.rel (0) target = $region29
    $region28: #{tpu_custom_call.1} parent=1 // pred_region
      %235 = dma.done [#allocation3], 256
    $region29: #{tpu_custom_call.1} parent=1 // pred_fallthru
      _
    %236 = vsyncpa [#allocation3], 1

</llo_original>
